<compile_context>
chip_gen: v7x
topology: tpu7x:2x2x1
jax: 0.10.0
libtpu: 0.0.40
codegen_flags: <defaults>
</compile_context>

<pallas_src>
import jax
import jax.numpy as jnp
from jax.experimental import pallas as pl
from jax.experimental.pallas import tpu as pltpu


def _make_linear_scale_kernel(scale, bias):
    scale = float(scale)
    bias = float(bias)

    def kernel(x_ref, o_ref):
        # Elementwise affine on the whole VMEM tile; weak-typed Python scalars
        # keep the math in the input dtype (same-dtype behavior as torch).
        o_ref[...] = (x_ref[...] * scale + bias).astype(o_ref.dtype)

    return kernel


def _per_generation_defaults():
    """(target_block_bytes, vmem_limit_bytes) tuned per TPU generation."""
    try:
        kind = jax.devices()[0].device_kind.lower()
    except Exception:
        kind = ""
    if "v7" in kind or "7x" in kind:
        # ~3.2 TB/s HBM: 8 MiB blocks amortize the ~0.35 us per-step overhead;
        # 2 in + 2 out buffers = 32 MiB -> raise scoped VMEM, stay well under
        # the 64 MiB physical ceiling.
        return 8 << 20, 48 << 20
    if "v6" in kind:
        # 4 MiB blocks -> 16 MiB of buffers, inside the 32 MiB default limit.
        return 4 << 20, None
    # v5e / unknown: 2 MiB blocks -> 8 MiB of buffers, inside the 16 MiB default.
    return 2 << 20, None


def _choose_blocking(rows, lane, itemsize, target_block_bytes):
    """Pick (block_rows, grid_steps) for a (rows, lane) slab."""
    # Sublane packing: 8 for 4-byte, 16 for 2-byte, 32 for 1-byte dtypes.
    pack = max(8, 32 // itemsize)
    if rows <= pack:
        return rows, 1  # single full-extent block (always a legal BlockSpec)
    # Rows per block allowed by the VMEM budget.
    budget_rows = max(pack, (target_block_bytes // (lane * itemsize)) // pack * pack)
    # At least 4 (and an even number of) grid steps: DMA/compute overlap and
    # balanced sharding across v7x's 2 TensorCores.
    steps = max(4, pl.cdiv(rows, budget_rows))
    if steps % 2:
        steps += 1
    block_rows = max(pack, pl.cdiv(pl.cdiv(rows, steps), pack) * pack)
    block_rows = min(block_rows, budget_rows)
    return block_rows, pl.cdiv(rows, block_rows)


def linear_scale(x, scale, bias, *, target_block_bytes=None,
                 min_kernel_bytes=256 * 1024):
    """out = x * scale + bias (Pallas TPU kernel for the common case).

    scale / bias are Python scalars fixed at trace time, mirroring the
    PyTorch module which stores them at __init__.
    """
    scale = float(scale)
    bias = float(bias)
    dtype = x.dtype
    n = x.size
    if n == 0:
        return x
    itemsize = jnp.dtype(dtype).itemsize

    # Cases where a standalone Pallas call cannot beat XLA's fused elementwise
    # op: tiny tensors (launch overhead dominates), lane-ragged sizes (would
    # need an extra full-HBM pad/slice pass), non-float dtypes (kernel assumes
    # float math, like the module's intended usage).
    if (n * itemsize < min_kernel_bytes
            or n % 128 != 0
            or not jnp.issubdtype(dtype, jnp.floating)):
        return x * scale + bias

    # Lane width: widest power of two >= 128 dividing n, so the flat array
    # reshapes to a lane-dense (rows, lane) slab with zero padding and
    # full-width unmasked vector stores.
    lane = 128
    for c in (2048, 1024, 512, 256):
        if n % c == 0:
            lane = c
            break
    rows = n // lane

    if target_block_bytes is None:
        target_block_bytes, vmem_limit = _per_generation_defaults()
    else:
        vmem_limit = None
    block_rows, steps = _choose_blocking(rows, lane, itemsize, target_block_bytes)

    x2 = x.reshape(rows, lane)  # pure metadata change, no HBM copy

    out2 = pl.pallas_call(
        _make_linear_scale_kernel(scale, bias),
        out_shape=jax.ShapeDtypeStruct((rows, lane), dtype),
        grid_spec=pltpu.PrefetchScalarGridSpec(
            num_scalar_prefetch=0,
            grid=(steps,),
            # If block_rows does not divide rows, Pallas masks the partial
            # final block (block_rows is a multiple of the sublane packing,
            # lane a multiple of 128) -- no host-side pad/slice passes needed.
            in_specs=[pl.BlockSpec((block_rows, lane), lambda i: (i, 0))],
            out_specs=pl.BlockSpec((block_rows, lane), lambda i: (i, 0)),
        ),
        compiler_params=pltpu.CompilerParams(
            # Every row block is independent -> shard the row axis across the
            # two v7x TensorCores; harmless on v5e/v6e.
            dimension_semantics=("parallel",),
            vmem_limit_bytes=vmem_limit,
        ),
    )(x2)

    return out2.reshape(x.shape)


if __name__ == "__main__":
    key = jax.random.PRNGKey(0)
    k1, k2, k3 = jax.random.split(key, 3)
    scale_v, bias_v = 2.5, -0.75  # fixed "parameters", as in LinearScale.__init__

    # 1) Module-sized activation [B, C, H, W]; force it through the kernel
    #    path (it would otherwise take the small-input bypass).
    x_small = jax.random.normal(k1, (2, 4, 16, 16), dtype=jnp.float32)
    out_small = jax.block_until_ready(
        linear_scale(x_small, scale_v, bias_v, min_kernel_bytes=0))
    ref_small = x_small * scale_v + bias_v
    assert out_small.shape == x_small.shape and out_small.dtype == x_small.dtype
    assert jnp.allclose(out_small, ref_small, atol=1e-6, rtol=1e-6)

    # 2) Larger f32 tensor -> multi-step pipelined kernel path (default knobs).
    x_large = jax.random.normal(k2, (8, 64, 64, 32), dtype=jnp.float32)
    out_large = jax.block_until_ready(linear_scale(x_large, scale_v, bias_v))
    ref_large = x_large * scale_v + bias_v
    assert jnp.allclose(out_large, ref_large, atol=1e-6, rtol=1e-6)

    # 3) bf16 tensor -> exercises the 16-row sublane-packing path.
    x_bf16 = jax.random.normal(k3, (4, 64, 64, 32), dtype=jnp.bfloat16)
    out_bf16 = jax.block_until_ready(linear_scale(x_bf16, scale_v, bias_v))
    ref_bf16 = x_bf16 * scale_v + bias_v
    assert out_bf16.dtype == jnp.bfloat16
    assert jnp.allclose(out_bf16.astype(jnp.float32),
                        ref_bf16.astype(jnp.float32), atol=2e-2, rtol=2e-2)

    # 4) Ragged / tiny input -> plain-JAX bypass, identical semantics.
    x_rag = jax.random.normal(k1, (3, 5, 7), dtype=jnp.float32)
    out_rag = jax.block_until_ready(linear_scale(x_rag, scale_v, bias_v))
    assert jnp.allclose(out_rag, x_rag * scale_v + bias_v, atol=1e-6, rtol=1e-6)

    print("KERNEL_OK")
</pallas_src>

<mosaic_0001>
module attributes {stable_mosaic.version = 11 : i64} {
  func.func @kernel(%arg0: i32, %arg1: memref<1x2048xf32, #tpu.memory_space<vmem>>, %arg2: memref<1x2048xf32, #tpu.memory_space<vmem>>) attributes {dimension_semantics = [#tpu.dimension_semantics<parallel>], iteration_bounds = array<i64: 1>, scalar_prefetch = 0 : i64, scratch_operands = 0 : i64, tpu.core_type = #tpu.core_type<tc>, window_params = [{transform_indices = @transform_0, window_bounds = array<i64: 1, 2048>}, {transform_indices = @transform_1, window_bounds = array<i64: 1, 2048>}]} {
    %c0 = arith.constant 0 : index
    %c0_0 = arith.constant 0 : index
    %0 = vector.load %arg1[%c0, %c0_0] : memref<1x2048xf32, #tpu.memory_space<vmem>>, vector<1x2048xf32>
    %cst = arith.constant 2.500000e+00 : f32
    %1 = vector.broadcast %cst : f32 to vector<1x2048xf32>
    %2 = arith.mulf %0, %1 : vector<1x2048xf32>
    %cst_1 = arith.constant -7.500000e-01 : f32
    %3 = vector.broadcast %cst_1 : f32 to vector<1x2048xf32>
    %4 = arith.addf %2, %3 : vector<1x2048xf32>
    %c0_2 = arith.constant 0 : index
    %c0_3 = arith.constant 0 : index
    %5 = vector.load %arg2[%c0_2, %c0_3] : memref<1x2048xf32, #tpu.memory_space<vmem>>, vector<1x2048xf32>
    tpu.vector_store %arg2[%c0_2, %c0_3], %4 {strides = array<i32>} : memref<1x2048xf32, #tpu.memory_space<vmem>>, vector<1x2048xf32>,
    return
  }
  func.func @transform_0(%arg0: i32) -> (i32, i32) {
    %c0_i32 = arith.constant 0 : i32
    %c0_i32_0 = arith.constant 0 : i32
    return %arg0, %c0_i32 : i32, i32
  }
  func.func @transform_1(%arg0: i32) -> (i32, i32) {
    %c0_i32 = arith.constant 0 : i32
    %c0_i32_0 = arith.constant 0 : i32
    return %arg0, %c0_i32 : i32, i32
  }
}

</mosaic_0001>

<llo_original>
// kernel: tpu_custom_call.1
$region0: #{tpu_custom_call.1}
  #allocation0 [shape = 'u32[]', space=smem, size = 0x4, offset = 0x4, fixed_abs, tag = 'smem constant byte address 0x4 - core index']
  #allocation1 [shape = 'u32[144,128]{1,0:T(1,128)}', space=vmem, size = 0x12000, scoped, tag = 'internal scratch']
  %s0 = inlined_call_operand.hbm [shape: f32[1,2048], index: 0, kind: input, shape index: {}]
  %s1 = inlined_call_operand.hbm [shape: f32[1,2048], index: 1, kind: output, shape index: {}]
  %s2 = sld [smem:[#allocation0]]
  $region18: #{tpu_custom_call.1} parent=0
    _
  %s4 = ssub.s32 1, %s2
  %s5 = scalar_select 0, %s4, %s2
  $region1: #{tpu_custom_call.1} parent=0
    #allocation2 [shape = 'u8[8192]{0}', space=vmem, size = 0x2000, scoped, tag = 'input window, operand 0, single buffered']
    #allocation3 [shape = 's32[1]{0}', space=sflag, size = 0x4, scoped, tag = 'scoped memory for tpu_custom_call.1']
    #allocation4 [shape = 's32[1]{0}', space=sflag, size = 0x4, scoped, tag = 'scoped memory for tpu_custom_call.1']
    #allocation5 [shape = 'u8[8192]{0}', space=vmem, size = 0x2000, scoped, tag = 'output window, operand 0, single buffered']
    %6 = vsyncpa [#allocation3], 0
    %7 = vsyncpa [#allocation4], 0
    // Predicated region
    $region2: #{tpu_custom_call.1} parent=1 // pred_check
      _
    $region3: #{tpu_custom_call.1} parent=1 // pred_check_branch
      %9 = sbr.rel (0) target = $region5
    $region4: #{tpu_custom_call.1} parent=1 // pred_region
      %s11 = ssub.s32 256, 256
      %12 = vsyncadd [#allocation3], %s11
      %s14 = sshll.u32 [#allocation2], 4
      %s15 = int_to_ptr.vmem [resolvable:$true] %s14
      %17 = dma.hbm_to_vmem [thread:$0]  %s0, 256, %s15, [#allocation3]
    $region5: #{tpu_custom_call.1} parent=1 // pred_fallthru
      _
    // Predicated region
    $region6: #{tpu_custom_call.1} parent=1 // pred_check
      _
    $region7: #{tpu_custom_call.1} parent=1 // pred_check_branch
      %19 = sbr.rel (0) target = $region9
    $region8: #{tpu_custom_call.1} parent=1 // pred_region
      %20 = dma.done [#allocation3], 256
    $region9: #{tpu_custom_call.1} parent=1 // pred_fallthru
      _
    %v21 = vld [vmem:[#allocation2] sm:$0xff]
    %v22 = vld [vmem:[#allocation2 + $0x8] sm:$0xff]
    %v23 = vmul.f32 %v21, 2.5
    %v24 = vmul.f32 %v22, 2.5
    %v25 = vadd.f32 %v23, -0.75
    %v26 = vadd.f32 %v24, -0.75
    %27 = vst [vmem:[#allocation5] sm:$0xff] %v25
    %28 = vst [vmem:[#allocation5 + $0x8] sm:$0xff] %v26
    // Predicated region
    $region10: #{tpu_custom_call.1} parent=1 // pred_check
      _
    $region11: #{tpu_custom_call.1} parent=1 // pred_check_branch
      %30 = sbr.rel (0) target = $region13
    $region12: #{tpu_custom_call.1} parent=1 // pred_region
      %s32 = ssub.s32 256, 256
      %33 = vsyncadd [#allocation4], %s32
      %s35 = sshll.u32 [#allocation5], 4
      %s36 = int_to_ptr.vmem [resolvable:$true] %s35
      %38 = dma.vmem_to_hbm [thread:$0]  %s36, 256, %s1, [#allocation4]
    $region13: #{tpu_custom_call.1} parent=1 // pred_fallthru
      _
    // Predicated region
    $region14: #{tpu_custom_call.1} parent=1 // pred_check
      _
    $region15: #{tpu_custom_call.1} parent=1 // pred_check_branch
      %40 = sbr.rel (0) target = $region17
    $region16: #{tpu_custom_call.1} parent=1 // pred_region
      %41 = dma.done [#allocation4], 256
    $region17: #{tpu_custom_call.1} parent=1 // pred_fallthru
      _
    %42 = vsyncpa [#allocation3], 1
    %43 = vsyncpa [#allocation4], 1

</llo_original>
